<compile_context>
chip_gen: v5e
topology: v5e:2x2
jax: 0.10.0
libtpu: 0.0.40
codegen_flags: <defaults>
</compile_context>

<pallas_src>
import math

import jax
import jax.numpy as jnp
from jax.experimental import pallas as pl
from jax.experimental.pallas import tpu as pltpu

_LANE = 128     # lane width (last dim must be a multiple of this, or full dim)
_SUBLANE = 8    # sublane width (second-to-last dim)


def _round_up(v, m):
    return (v + m - 1) // m * m


def _choose_tm(M, N_pad, tk, x_itemsize, w_itemsize, out_itemsize,
               vmem_budget_bytes):
    """Pick an M-tile size from a VMEM budget (inputs/outputs double-buffered)."""
    # fixed cost: double-buffered weight K-tile + double-buffered bias row
    fixed = 2 * tk * N_pad * w_itemsize + 2 * N_pad * 4
    # per-row cost: dbl-buffered x tile + dbl-buffered out tile + f32 accumulator
    per_row = 2 * tk * x_itemsize + 2 * N_pad * out_itemsize + N_pad * 4
    tm = max(_SUBLANE, (vmem_budget_bytes - fixed) // per_row)
    tm = min(int(tm), 512)           # ~512 rows already sits on the HBM roofline plateau
    tm = (tm // _SUBLANE) * _SUBLANE
    if tm >= M:
        if M > _SUBLANE:
            # keep >= 2 M-tiles so the single "parallel" axis can be sharded
            # across the two TensorCores of a v7x chip (free on v5e/v6e).
            tm = _round_up(-(-M // 2), _SUBLANE)
            if tm >= M:
                tm = M
        else:
            tm = M                   # block == full array dim is always legal
    return tm


def _linear_kernel(x_ref, w_ref, b_ref, o_ref, acc_ref):
    # x_ref: [tm, tk] (bf16), w_ref: [tk, N_pad] (bf16), b_ref: [1, N_pad] (f32)
    # o_ref: [tm, N_pad] (f32), acc_ref: [tm, N_pad] f32 scratch (lives across k)
    k = pl.program_id(1)

    @pl.when(k == 0)
    def _():
        acc_ref[...] = jnp.zeros_like(acc_ref)

    acc_ref[...] += jnp.dot(x_ref[...], w_ref[...],
                            preferred_element_type=jnp.float32)

    @pl.when(k == pl.num_programs(1) - 1)
    def _():
        o_ref[...] = (acc_ref[...] + b_ref[...]).astype(o_ref.dtype)


def linear_pallas(x2d, w_padded, bias_padded2d, *, tm=None, tk=None,
                  vmem_budget_bytes=32 * 1024 * 1024,
                  vmem_limit_bytes=48 * 1024 * 1024):
    """x2d: [M, K] float, w_padded: [K_pad, N_pad] (compute dtype, zero-padded),
    bias_padded2d: [1, N_pad] f32 (zero-padded). Returns [M, N_pad] f32."""
    M, K = x2d.shape
    K_pad, N_pad = w_padded.shape
    assert K_pad % _LANE == 0 and N_pad % _LANE == 0 and K <= K_pad

    # lane-dense x: cast to the compute dtype, zero-pad K up to K_pad
    x_c = x2d.astype(w_padded.dtype)
    if K_pad != K:
        x_c = jnp.pad(x_c, ((0, 0), (0, K_pad - K)))

    if tk is None:
        tk = min(K_pad, 512)
    if tm is None:
        tm = _choose_tm(M, N_pad, tk, x_c.dtype.itemsize,
                        w_padded.dtype.itemsize, 4, vmem_budget_bytes)

    grid = (pl.cdiv(M, tm), pl.cdiv(K_pad, tk))

    cost = pl.CostEstimate(
        flops=2 * M * K_pad * N_pad,
        transcendentals=0,
        bytes_accessed=(M * K_pad * x_c.dtype.itemsize
                        + K_pad * N_pad * w_padded.dtype.itemsize
                        + N_pad * 4
                        + M * N_pad * 4),
    )

    return pl.pallas_call(
        _linear_kernel,
        out_shape=jax.ShapeDtypeStruct((M, N_pad), jnp.float32),
        grid_spec=pltpu.PrefetchScalarGridSpec(
            num_scalar_prefetch=0,
            grid=grid,
            in_specs=[
                pl.BlockSpec((tm, tk), lambda i, k: (i, k)),     # x row/K tile
                pl.BlockSpec((tk, N_pad), lambda i, k: (k, 0)),  # weight K tile
                pl.BlockSpec((1, N_pad), lambda i, k: (0, 0)),   # bias row
            ],
            out_specs=pl.BlockSpec((tm, N_pad), lambda i, k: (i, 0)),
            scratch_shapes=[pltpu.VMEM((tm, N_pad), jnp.float32)],
        ),
        compiler_params=pltpu.CompilerParams(
            dimension_semantics=("parallel", "arbitrary"),
            vmem_limit_bytes=vmem_limit_bytes,
        ),
        cost_estimate=cost,
    )(x_c, w_padded, bias_padded2d)


class TransformerFeatureExtractor:
    """JAX/Pallas port of the PyTorch module (forward = single nn.Linear)."""

    # below ~4M MACs the pallas_call launch/per-step overhead dominates; let XLA fuse it
    _MIN_PALLAS_MACS = 1 << 22

    def __init__(self, input_nc, ngf, key, compute_dtype=jnp.bfloat16,
                 force_pallas=False):
        kw, kb = jax.random.split(key)
        bound = 1.0 / math.sqrt(float(input_nc))
        # PyTorch nn.Linear layout: weight [ngf, input_nc], bias [ngf]
        w_pt = jax.random.uniform(kw, (ngf, input_nc), jnp.float32,
                                  minval=-bound, maxval=bound)
        b = jax.random.uniform(kb, (ngf,), jnp.float32,
                               minval=-bound, maxval=bound)

        self.input_nc = int(input_nc)
        self.ngf = int(ngf)
        self.force_pallas = force_pallas

        # f32 master copies (reference / small-shape fallback path)
        self.weight_kn = w_pt.T          # [K, N] == PyTorch weight.T
        self.bias = b                    # [N]

        # lane-dense, compute-dtype copies for the kernel: padded ONCE here so
        # the per-forward cost is zero (zero rows/cols don't change the matmul).
        K_pad = _round_up(self.input_nc, _LANE)
        N_pad = _round_up(self.ngf, _LANE)
        w_padded = jnp.zeros((K_pad, N_pad), jnp.float32)
        w_padded = w_padded.at[:self.input_nc, :self.ngf].set(self.weight_kn)
        self._w_padded = w_padded.astype(compute_dtype)          # [K_pad, N_pad]
        self._b_padded = jnp.zeros((1, N_pad), jnp.float32).at[0, :self.ngf].set(b)

    def __call__(self, x):
        # x: [..., input_nc] -> [..., ngf]
        lead = x.shape[:-1]
        x2d = x.reshape(-1, self.input_nc)
        M = x2d.shape[0]

        macs = M * self.input_nc * self.ngf
        if not self.force_pallas and macs < self._MIN_PALLAS_MACS:
            # tiny problem: a custom call is pure overhead, plain XLA is faster
            y2d = x2d @ self.weight_kn + self.bias
            return y2d.reshape(*lead, self.ngf)

        y_pad = linear_pallas(x2d, self._w_padded, self._b_padded)
        return y_pad[:, :self.ngf].reshape(*lead, self.ngf)


if __name__ == "__main__":
    key = jax.random.PRNGKey(0)
    k_in, k_mod = jax.random.split(key)

    B, S, C_in, C_out = 2, 8, 32, 64   # batch=2, seq=8, input_nc=32, ngf=64
    x = jax.random.normal(k_in, (B, S, C_in), jnp.float32)

    # force_pallas=True so the tiny test shape actually exercises the kernel
    # (the default dispatch would route a shape this small to plain XLA).
    model = TransformerFeatureExtractor(C_in, C_out, k_mod, force_pallas=True)
    y = jax.block_until_ready(model(x))
    assert y.shape == (B, S, C_out)
    assert y.dtype == jnp.float32

    # Reference with the same precision path (bf16 inputs, f32 accumulate)
    x2d = x.reshape(-1, C_in)
    y_ref_bf16 = (jnp.dot(x2d.astype(jnp.bfloat16),
                          model.weight_kn.astype(jnp.bfloat16),
                          preferred_element_type=jnp.float32)
                  + model.bias).reshape(B, S, C_out)
    # Pure-f32 reference (exact PyTorch semantics) with a bf16-sized tolerance
    y_ref_f32 = (x2d @ model.weight_kn + model.bias).reshape(B, S, C_out)

    assert jnp.allclose(y, y_ref_bf16, atol=1e-2, rtol=1e-2)
    assert jnp.allclose(y, y_ref_f32, atol=5e-2, rtol=5e-2)

    print("KERNEL_OK")
</pallas_src>

<mosaic_0001>
module attributes {stable_mosaic.version = 11 : i64} {
  func.func @_linear_kernel(%arg0: i32, %arg1: i32, %arg2: memref<8x128xbf16, #tpu.memory_space<vmem>>, %arg3: memref<128x128xbf16, #tpu.memory_space<vmem>>, %arg4: memref<1x128xf32, #tpu.memory_space<vmem>>, %arg5: memref<8x128xf32, #tpu.memory_space<vmem>>, %arg6: memref<8x128xf32, #tpu.memory_space<vmem>>) attributes {dimension_semantics = [#tpu.dimension_semantics<parallel>, #tpu.dimension_semantics<arbitrary>], iteration_bounds = array<i64: 2, 1>, scalar_prefetch = 0 : i64, scratch_operands = 1 : i64, tpu.core_type = #tpu.core_type<tc>, window_params = [{transform_indices = @transform_0, window_bounds = array<i64: 8, 128>}, {transform_indices = @transform_1, window_bounds = array<i64: 128, 128>}, {pipeline_mode = #tpu.pipeline_mode<synchronous>, transform_indices = @transform_2, window_bounds = array<i64: 1, 128>}, {transform_indices = @transform_3, window_bounds = array<i64: 8, 128>}]} {
    %c0_i32 = arith.constant 0 : i32
    %0 = arith.cmpi eq, %arg1, %c0_i32 : i32
    %1 = arith.extui %0 : i1 to i32
    %c0_i32_0 = arith.constant 0 : i32
    %2 = arith.cmpi ne, %1, %c0_i32_0 : i32
    scf.if %2 {
      %cst_10 = arith.constant 0.000000e+00 : f32
      %12 = vector.broadcast %cst_10 : f32 to vector<8x128xf32>
      %c0_11 = arith.constant 0 : index
      %c0_12 = arith.constant 0 : index
      %13 = vector.load %arg6[%c0_11, %c0_12] : memref<8x128xf32, #tpu.memory_space<vmem>>, vector<8x128xf32>
      tpu.vector_store %arg6[%c0_11, %c0_12], %12 {strides = array<i32>} : memref<8x128xf32, #tpu.memory_space<vmem>>, vector<8x128xf32>,
    } else {
    }
    %c0 = arith.constant 0 : index
    %c0_1 = arith.constant 0 : index
    %3 = vector.load %arg6[%c0, %c0_1] : memref<8x128xf32, #tpu.memory_space<vmem>>, vector<8x128xf32>
    %c0_2 = arith.constant 0 : index
    %c0_3 = arith.constant 0 : index
    %4 = vector.load %arg2[%c0_2, %c0_3] : memref<8x128xbf16, #tpu.memory_space<vmem>>, vector<8x128xbf16>
    %c0_4 = arith.constant 0 : index
    %c0_5 = arith.constant 0 : index
    %5 = vector.load %arg3[%c0_4, %c0_5] : memref<128x128xbf16, #tpu.memory_space<vmem>>, vector<128x128xbf16>
    %cst = arith.constant dense<0.000000e+00> : vector<8x128xf32>
    %6 = tpu.matmul %4, %5, %cst {dimension_numbers = #tpu.dot_dimension_numbers<[1], [0], [0], [1], [0, 0, 1, 1], [], []>} : vector<8x128xbf16>, vector<128x128xbf16>, vector<8x128xf32> -> vector<8x128xf32>
    %7 = arith.addf %3, %6 : vector<8x128xf32>
    %c0_6 = arith.constant 0 : index
    %c0_7 = arith.constant 0 : index
    %8 = vector.load %arg6[%c0_6, %c0_7] : memref<8x128xf32, #tpu.memory_space<vmem>>, vector<8x128xf32>
    tpu.vector_store %arg6[%c0_6, %c0_7], %7 {strides = array<i32>} : memref<8x128xf32, #tpu.memory_space<vmem>>, vector<8x128xf32>,
    %c0_i32_8 = arith.constant 0 : i32
    %9 = arith.cmpi eq, %arg1, %c0_i32_8 : i32
    %10 = arith.extui %9 : i1 to i32
    %c0_i32_9 = arith.constant 0 : i32
    %11 = arith.cmpi ne, %10, %c0_i32_9 : i32
    scf.if %11 {
      %c0_10 = arith.constant 0 : index
      %c0_11 = arith.constant 0 : index
      %12 = vector.load %arg6[%c0_10, %c0_11] : memref<8x128xf32, #tpu.memory_space<vmem>>, vector<8x128xf32>
      %c0_12 = arith.constant 0 : index
      %c0_13 = arith.constant 0 : index
      %13 = vector.load %arg4[%c0_12, %c0_13] : memref<1x128xf32, #tpu.memory_space<vmem>>, vector<1x128xf32>
      %14 = vector.broadcast %13 : vector<1x128xf32> to vector<8x128xf32>
      %15 = arith.addf %12, %14 : vector<8x128xf32>
      %c0_14 = arith.constant 0 : index
      %c0_15 = arith.constant 0 : index
      %16 = vector.load %arg5[%c0_14, %c0_15] : memref<8x128xf32, #tpu.memory_space<vmem>>, vector<8x128xf32>
      tpu.vector_store %arg5[%c0_14, %c0_15], %15 {strides = array<i32>} : memref<8x128xf32, #tpu.memory_space<vmem>>, vector<8x128xf32>,
    } else {
    }
    return
  }
  func.func @transform_0(%arg0: i32, %arg1: i32) -> (i32, i32) {
    %c0_i32 = arith.constant 0 : i32
    return %arg0, %arg1 : i32, i32
  }
  func.func @transform_1(%arg0: i32, %arg1: i32) -> (i32, i32) {
    %c0_i32 = arith.constant 0 : i32
    %c0_i32_0 = arith.constant 0 : i32
    return %arg1, %c0_i32 : i32, i32
  }
  func.func @transform_2(%arg0: i32, %arg1: i32) -> (i32, i32) {
    %c0_i32 = arith.constant 0 : i32
    %c0_i32_0 = arith.constant 0 : i32
    %c0_i32_1 = arith.constant 0 : i32
    return %c0_i32, %c0_i32_0 : i32, i32
  }
  func.func @transform_3(%arg0: i32, %arg1: i32) -> (i32, i32) {
    %c0_i32 = arith.constant 0 : i32
    %c0_i32_0 = arith.constant 0 : i32
    return %arg0, %c0_i32 : i32, i32
  }
}

</mosaic_0001>

<llo_original>
// kernel: tpu_custom_call.1
$region0: #{tpu_custom_call.1}
  #allocation0 [shape = 'u32[]', space=smem, size = 0x4, offset = 0x4, fixed_abs, tag = 'smem constant byte address 0x4 - core index']
  #allocation1 [shape = 'u32[72,128]{1,0:T(1,128)}', space=vmem, size = 0x9000, scoped, tag = 'internal scratch']
  #allocation2 [shape = 'f32[8,128]{1,0:T(8,128)}', space=vmem, size = 0x1000, scoped, tag = 'scratch operand']
  %s0 = inlined_call_operand.hbm [shape: bf16[16,128], index: 0, kind: input, shape index: {}]
  %s1 = inlined_call_operand.hbm [shape: bf16[128,128], index: 1, kind: input, shape index: {}]
  %s2 = inlined_call_operand.vmem [shape: f32[1,128], index: 2, kind: input, shape index: {}]
  %s3 = inlined_call_operand.hbm [shape: f32[16,128], index: 3, kind: output, shape index: {}]
  %s4 = sld [smem:[#allocation0]]
  $region61: #{tpu_custom_call.1} parent=0
    _
  %s6 = ssub.s32 1, %s4
  %s7 = scalar_select 0, %s6, %s4
  $region1: #{tpu_custom_call.1} parent=0
    #allocation3 [shape = 'u8[4096]{0}', space=vmem, size = 0x1000, scoped, tag = 'input window, operand 0']
    #allocation4 [shape = 's32[2]{0}', space=sflag, size = 0x8, scoped, tag = 'scoped memory for tpu_custom_call.1']
    #allocation5 [shape = 's32[2]{0}', space=sflag, size = 0x8, scoped, tag = 'scoped memory for tpu_custom_call.1']
    #allocation6 [shape = 'u8[32768]{0}', space=vmem, size = 0x8000, scoped, tag = 'input window, operand 1, single buffered']
    #allocation7 [shape = 's32[1]{0}', space=sflag, size = 0x4, scoped, tag = 'scoped memory for tpu_custom_call.1']
    #allocation8 [shape = 'u8[8192]{0}', space=vmem, size = 0x2000, scoped, tag = 'output window, operand 0']
    %8 = vsyncpa [#allocation4], 0
    %s9 = scalar_lea.sflag [#allocation4], 1
    %10 = vsyncpa %s9, 0
    %11 = vsyncpa [#allocation7], 0
    %12 = vsyncpa [#allocation5], 0
    %s13 = scalar_lea.sflag [#allocation5], 1
    %14 = vsyncpa %s13, 0
    loop: start=0, step=1, limit=4
    $region2: #{tpu_custom_call.1} parent=1 // loop_pre_header
      _
    $region3: #{tpu_custom_call.1} parent=1 // loop_header
      %s16 = sphi 0, %s20
      %p17 = scmp.ge.s32.totalorder %s16, 4
      %s23 = sphi 0, %s35
      %s24 = sphi 0, %s31
      %s25 = sphi 0, %s23
      %s26 = sphi 0, %s24
      %s27 = sphi 0, %s25
      %s28 = sphi 0, %s26
      %s40 = sphi 0, %s42
      %s43 = sphi 0, %s40
      %s44 = sphi 0, %s43
      %s60 = sphi 0, %s44
      %s66 = sphi 0, %s68
      %s69 = sphi 0, %s66
      %s70 = sphi 0, %s69
      %s86 = sphi 0, %s70
      %s90 = sphi 0, %s90
      %s92 = sphi 0, %s90
      %s93 = sphi 0, %s92
      %s107 = sphi 0, %s93
      %s113 = sphi 0, %s115
      %s116 = sphi 0, %s113
      %s117 = sphi 0, %s116
      %s133 = sphi 0, %s117
    $region4: #{tpu_custom_call.1} parent=1 // loop_header_branch
      %19 = sbr.rel (%p17) target = $region8
    $region5: #{tpu_custom_call.1} parent=1 // loop_body
      %s21 = ssub.s32 %s16, 1
      %s22 = ssub.s32 %s16, 2
      %s29 = sadd.s32 1, %s24
      %p30 = scmp.ge.s32.totalorder %s29, 1
      %s31 = scalar_select %p30, 0, %s29
      %s32 = sadd.s32 1, %s23
      %s33 = scalar_select %p30, %s32, %s23
      %p34 = scmp.ge.s32.totalorder %s33, 2
      %s35 = scalar_select %p34, 0, %s33
      %s36 = ssub.s32 %s23, %s35
      %s37 = ssub.s32 %s24, %s31
      %s38 = sor.u32 %s36, %s37
      %p39 = scmp.eq.s32.totalorder %s38, 0
      %s41 = sadd.s32 %s40, 1
      %s42 = scalar_select %p39, %s40, %s41
      %p45 = pneg %p39
      %p46 = scmp.eq.s32.totalorder %s16, 1
      %p47 = por %p45, %p46
      %p48 = scmp.ne.s32.totalorder %s40, %s43
      %p49 = scmp.eq.s32.totalorder %s16, 0
      %p50 = por %p48, %p49
      %p51 = scmp.ne.s32.totalorder %s40, %s43
      %p52 = scmp.eq.s32.totalorder %s21, 1
      %p53 = por %p51, %p52
      %p54 = scmp.ne.s32.totalorder %s43, %s44
      %p55 = scmp.eq.s32.totalorder %s21, 0
      %p56 = por %p54, %p55
      %p57 = scmp.ne.s32.totalorder %s43, %s44
      %p58 = scmp.eq.s32.totalorder %s22, 1
      %p59 = por %p57, %p58
      %p61 = scmp.ne.s32.totalorder %s44, %s60
      %p62 = scmp.eq.s32.totalorder %s22, 0
      %p63 = por %p61, %p62
      %s64 = ssub.s32 %s24, %s31
      %p65 = scmp.eq.s32.totalorder %s64, 0
      %s67 = sadd.s32 %s66, 1
      %s68 = scalar_select %p65, %s66, %s67
      %p71 = pneg %p65
      %p72 = scmp.eq.s32.totalorder %s16, 1
      %p73 = por %p71, %p72
      %p74 = scmp.ne.s32.totalorder %s66, %s69
      %p75 = scmp.eq.s32.totalorder %s16, 0
      %p76 = por %p74, %p75
      %p77 = scmp.ne.s32.totalorder %s66, %s69
      %p78 = scmp.eq.s32.totalorder %s21, 1
      %p79 = por %p77, %p78
      %p80 = scmp.ne.s32.totalorder %s69, %s70
      %p81 = scmp.eq.s32.totalorder %s21, 0
      %p82 = por %p80, %p81
      %p83 = scmp.ne.s32.totalorder %s69, %s70
      %p84 = scmp.eq.s32.totalorder %s22, 1
      %p85 = por %p83, %p84
      %p87 = scmp.ne.s32.totalorder %s70, %s86
      %p88 = scmp.eq.s32.totalorder %s22, 0
      %p89 = por %p87, %p88
      %s91 = sadd.s32 %s90, 1
      %p94 = scmp.eq.s32.totalorder %s16, 1
      %p95 = scmp.ne.s32.totalorder %s90, %s92
      %p96 = scmp.eq.s32.totalorder %s16, 0
      %p97 = por %p95, %p96
      %p98 = scmp.ne.s32.totalorder %s90, %s92
      %p99 = scmp.eq.s32.totalorder %s21, 1
      %p100 = por %p98, %p99
      %p101 = scmp.ne.s32.totalorder %s92, %s93
      %p102 = scmp.eq.s32.totalorder %s21, 0
      %p103 = por %p101, %p102
      %p104 = scmp.ne.s32.totalorder %s92, %s93
      %p105 = scmp.eq.s32.totalorder %s22, 1
      %p106 = por %p104, %p105
      %p108 = scmp.ne.s32.totalorder %s93, %s107
      %p109 = scmp.eq.s32.totalorder %s22, 0
      %p110 = por %p108, %p109
      %s111 = ssub.s32 %s23, %s35
      %p112 = scmp.eq.s32.totalorder %s111, 0
      %s114 = sadd.s32 %s113, 1
      %s115 = scalar_select %p112, %s113, %s114
      %p118 = pneg %p112
      %p119 = scmp.eq.s32.totalorder %s16, 1
      %p120 = por %p118, %p119
      %p121 = scmp.ne.s32.totalorder %s113, %s116
      %p122 = scmp.eq.s32.totalorder %s16, 0
      %p123 = por %p121, %p122
      %p124 = scmp.ne.s32.totalorder %s113, %s116
      %p125 = scmp.eq.s32.totalorder %s21, 1
      %p126 = por %p124, %p125
      %p127 = scmp.ne.s32.totalorder %s116, %s117
      %p128 = scmp.eq.s32.totalorder %s21, 0
      %p129 = por %p127, %p128
      %p130 = scmp.ne.s32.totalorder %s116, %s117
      %p131 = scmp.eq.s32.totalorder %s22, 1
      %p132 = por %p130, %p131
      %p134 = scmp.ne.s32.totalorder %s117, %s133
      %p135 = scmp.eq.s32.totalorder %s22, 0
      %p136 = por %p134, %p135
      %p137 = scmp.le.s32.totalorder 1, %s16
      %p138 = scmp.lt.s32.totalorder %s16, 3
      %p139 = pnand %p137, %p138
      %p140 = pneg %p139
      // Predicated region
      $region9: #{tpu_custom_call.1} parent=5 // pred_check
        _
      $region10: #{tpu_custom_call.1} parent=5 // pred_check_branch
        %142 = sbr.rel (%p139) target = $region12
      $region11: #{tpu_custom_call.1} parent=5 // pred_region
        %s143 = ssub.s32 %s16, 1
        // Predicated region
        $region13: #{tpu_custom_call.1} parent=11 // pred_check
          %p144 = pneg %p82
        $region14: #{tpu_custom_call.1} parent=11 // pred_check_branch
          %146 = sbr.rel (%p144) target = $region16
        $region15: #{tpu_custom_call.1} parent=11 // pred_region
          %s147 = smul.u32 16, %s26
          %149 = vsyncadd [#allocation7], 0
          %s150 = smul.addr %s147, 4
          %s151 = scalar_lea.hbm %s1, %s150
          %s152 = sshll.u32 %s151, 4
          %s153 = int_to_ptr.hbm [resolvable:$true] %s152
          %s154 = sshll.u32 [#allocation6], 4
          %s155 = int_to_ptr.vmem [resolvable:$true] %s154
          %160 = dma.hbm_to_vmem [thread:$0]  %s153, 1024, %s155, [#allocation7], 64, 64, 4
        $region16: #{tpu_custom_call.1} parent=11 // pred_fallthru
          _
        // Predicated region
        $region17: #{tpu_custom_call.1} parent=11 // pred_check
          %p161 = pneg %p103
        $region18: #{tpu_custom_call.1} parent=11 // pred_check_branch
          %163 = sbr.rel (%p161) target = $region20
        $region19: #{tpu_custom_call.1} parent=11 // pred_region
          _
        $region20: #{tpu_custom_call.1} parent=11 // pred_fallthru
          _
      $region12: #{tpu_custom_call.1} parent=5 // pred_fallthru
        _
      %p164 = scmp.lt.s32.totalorder %s16, 2
      // Predicated region
      $region21: #{tpu_custom_call.1} parent=5 // pred_check
        %p165 = pneg %p164
      $region22: #{tpu_custom_call.1} parent=5 // pred_check_branch
        %167 = sbr.rel (%p165) target = $region24
      $region23: #{tpu_custom_call.1} parent=5 // pred_region
        // Predicated region
        $region25: #{tpu_custom_call.1} parent=23 // pred_check
          %p168 = pneg %p50
        $region26: #{tpu_custom_call.1} parent=23 // pred_check_branch
          %170 = sbr.rel (%p168) target = $region28
        $region27: #{tpu_custom_call.1} parent=23 // pred_region
          %s171 = sand.u32 %s40, 1
          %s172 = scalar_lea.sflag [#allocation4], %s171
          %s173 = sand.u32 %s40, 1
          %s174 = smul.addr %s173, 4
          %s175 = scalar_lea.vmem [#allocation3], %s174
          %177 = vsyncadd %s172, 0
          %s178 = sadd.s32 %s24, %s23
          %s179 = smul.addr %s178, 4
          %s180 = scalar_lea.hbm %s0, %s179
          %s182 = sshll.u32 %s180, 4
          %s183 = int_to_ptr.hbm [resolvable:$true] %s182
          %s184 = sshll.u32 %s175, 4
          %s185 = int_to_ptr.vmem [resolvable:$true] %s184
          %187 = dma.hbm_to_vmem [thread:$0]  %s183, 64, %s185, %s172
        $region28: #{tpu_custom_call.1} parent=23 // pred_fallthru
          _
      $region24: #{tpu_custom_call.1} parent=5 // pred_fallthru
        _
      %p188 = scmp.le.s32.totalorder 1, %s16
      %p189 = scmp.lt.s32.totalorder %s16, 3
      %p190 = pnand %p188, %p189
      %p191 = pneg %p190
      // Predicated region
      $region29: #{tpu_custom_call.1} parent=5 // pred_check
        _
      $region30: #{tpu_custom_call.1} parent=5 // pred_check_branch
        %193 = sbr.rel (%p190) target = $region32
      $region31: #{tpu_custom_call.1} parent=5 // pred_region
        %s194 = ssub.s32 %s16, 1
        %s195 = sand.u32 %s43, 1
        %s196 = scalar_lea.sflag [#allocation4], %s195
        %s197 = sand.u32 %s43, 1
        %s198 = smul.addr %s197, 4
        %s199 = scalar_lea.vmem [#allocation3], %s198
        // Predicated region
        $region33: #{tpu_custom_call.1} parent=31 // pred_check
          %p200 = pneg %p56
        $region34: #{tpu_custom_call.1} parent=31 // pred_check_branch
          %202 = sbr.rel (%p200) target = $region36
        $region35: #{tpu_custom_call.1} parent=31 // pred_region
          %204 = dma.done %s196, 64
        $region36: #{tpu_custom_call.1} parent=31 // pred_fallthru
          _
        // Predicated region
        $region37: #{tpu_custom_call.1} parent=31 // pred_check
          %p205 = pneg %p82
        $region38: #{tpu_custom_call.1} parent=31 // pred_check_branch
          %207 = sbr.rel (%p205) target = $region40
        $region39: #{tpu_custom_call.1} parent=31 // pred_region
          %209 = dma.done [#allocation7], 1024
        $region40: #{tpu_custom_call.1} parent=31 // pred_fallthru
          _
        %s210 = sand.u32 %s43, 1
        %s211 = scalar_lea.sflag [#allocation4], %s210
        %s212 = sand.u32 %s43, 1
        %s213 = smul.addr %s212, 4
        %s214 = scalar_lea.vmem [#allocation3], %s213
        %p215 = pneg %p56
        %p216 = pneg %p53
        %p217 = pneg %p82
        %p218 = pneg %p79
        %p219 = pneg %p103
        %p220 = pneg %p100
        %p221 = pneg %p129
        %p222 = pneg %p126
        %s223 = sand.u32 %s116, 1
        %s224 = scalar_lea.sflag [#allocation5], %s223
        %s225 = sand.u32 %s116, 1
        %s226 = smul.addr %s225, 8
        %s227 = scalar_lea.vmem [#allocation8], %s226
        %s228 = smul.u32 16, %s26
        %p229 = scmp.eq.s32.totalorder %s26, 0
        // Predicated region
        $region41: #{tpu_custom_call.1} parent=31 // pred_check
          %p230 = pneg %p229
        $region42: #{tpu_custom_call.1} parent=31 // pred_check_branch
          %232 = sbr.rel (%p230) target = $region44
        $region43: #{tpu_custom_call.1} parent=31 // pred_region
          %233 = vst [vmem:[#allocation2] sm:$0xff] 0.0
        $region44: #{tpu_custom_call.1} parent=31 // pred_fallthru
          _
        %v234 = vld [vmem:[#allocation2] sm:$0xff]
        %v235 = vld [vmem:[%s199] sm:$0xf]
        %v236 = vld [vmem:[#allocation6] sm:$0xf]
        %v237 = vld [vmem:[#allocation6 + $0x4] sm:$0xf]
        %v238 = vld [vmem:[#allocation6 + $0x8] sm:$0xf]
        %v239 = vld [vmem:[#allocation6 + $0xc] sm:$0xf]
        %v240 = vld [vmem:[#allocation6 + $0x10] sm:$0xf]
        %v241 = vld [vmem:[#allocation6 + $0x14] sm:$0xf]
        %v242 = vld [vmem:[#allocation6 + $0x18] sm:$0xf]
        %v243 = vld [vmem:[#allocation6 + $0x1c] sm:$0xf]
        %v244 = vld [vmem:[#allocation6 + $0x20] sm:$0xf]
        %v245 = vld [vmem:[#allocation6 + $0x24] sm:$0xf]
        %v246 = vld [vmem:[#allocation6 + $0x28] sm:$0xf]
        %v247 = vld [vmem:[#allocation6 + $0x2c] sm:$0xf]
        %v248 = vld [vmem:[#allocation6 + $0x30] sm:$0xf]
        %v249 = vld [vmem:[#allocation6 + $0x34] sm:$0xf]
        %v250 = vld [vmem:[#allocation6 + $0x38] sm:$0xf]
        %v251 = vld [vmem:[#allocation6 + $0x3c] sm:$0xf]
        %v268 = vunpack.c.l.b16 %v236
        %v269 = vunpack.c.l.b16 %v237
        %v270 = vunpack.c.l.b16 %v238
        %v271 = vunpack.c.l.b16 %v239
        %v272 = vunpack.c.l.b16 %v240
        %v273 = vunpack.c.l.b16 %v241
        %v274 = vunpack.c.l.b16 %v242
        %v275 = vunpack.c.l.b16 %v243
        %v276 = vunpack.c.l.b16 %v244
        %v277 = vunpack.c.l.b16 %v245
        %v278 = vunpack.c.l.b16 %v246
        %v279 = vunpack.c.l.b16 %v247
        %v280 = vunpack.c.l.b16 %v248
        %v281 = vunpack.c.l.b16 %v249
        %v282 = vunpack.c.l.b16 %v250
        %v283 = vunpack.c.l.b16 %v251
        %v284 = vpack.c.b16 %v269, %v268
        %v285 = vpack.c.b16 %v271, %v270
        %v286 = vpack.c.b16 %v273, %v272
        %v287 = vpack.c.b16 %v275, %v274
        %v288 = vpack.c.b16 %v277, %v276
        %v289 = vpack.c.b16 %v279, %v278
        %v290 = vpack.c.b16 %v281, %v280
        %v291 = vpack.c.b16 %v283, %v282
        %300 = vmatpush.bf16.msra.mxu0 %v291
        %301 = vmatpush.bf16.msra.mxu0 %v290
        %302 = vmatpush.bf16.msra.mxu0 %v289
        %303 = vmatpush.bf16.msra.mxu0 %v288
        %304 = vmatpush.bf16.msra.mxu0 %v287
        %305 = vmatpush.bf16.msra.mxu0 %v286
        %306 = vmatpush.bf16.msra.mxu0 %v285
        %307 = vmatpush.bf16.msra.mxu0 %v284
        %308 = vmatmul.bf16.gmra.mxu0 %v235
        %v309 = vpop.f32.mrf.mxu0
        %v310 = vadd.f32 0.0, %v309
        %v311 = vpop.f32.mrf.mxu0
        %312 = vdwg.mxu0
        %v313 = vadd.f32 %v234, %v310
        %314 = vst [vmem:[#allocation2] sm:$0xff] %v313
        // Predicated region
        $region45: #{tpu_custom_call.1} parent=31 // pred_check
          %p315 = pneg %p229
        $region46: #{tpu_custom_call.1} parent=31 // pred_check_branch
          %317 = sbr.rel (%p315) target = $region48
        $region47: #{tpu_custom_call.1} parent=31 // pred_region
          %v318 = vld [vmem:[#allocation2] sm:$0xff]
          %v319 = vld [vmem:[%s2] sm:$0x1]
          %v321 = vperm.slane %v319, 0
          %v323 = vadd.f32 %v318, %v321
          %324 = vst [vmem:[%s227] sm:$0xff] %v323
        $region48: #{tpu_custom_call.1} parent=31 // pred_fallthru
          _
        %s325 = sand.u32 %s116, 1
        %s326 = scalar_lea.sflag [#allocation5], %s325
        %s327 = sand.u32 %s116, 1
        %s328 = smul.addr %s327, 8
        %s329 = scalar_lea.vmem [#allocation8], %s328
        // Predicated region
        $region49: #{tpu_custom_call.1} parent=31 // pred_check
          %p330 = pneg %p126
        $region50: #{tpu_custom_call.1} parent=31 // pred_check_branch
          %332 = sbr.rel (%p330) target = $region52
        $region51: #{tpu_custom_call.1} parent=31 // pred_region
          %334 = vsyncadd %s326, 0
          %s335 = smul.addr %s25, 8
          %s336 = scalar_lea.hbm %s3, %s335
          %s338 = sshll.u32 %s329, 4
          %s339 = int_to_ptr.vmem [resolvable:$true] %s338
          %s340 = sshll.u32 %s336, 4
          %s341 = int_to_ptr.hbm [resolvable:$true] %s340
          %343 = dma.vmem_to_hbm [thread:$0]  %s339, 128, %s341, %s326
        $region52: #{tpu_custom_call.1} parent=31 // pred_fallthru
          _
      $region32: #{tpu_custom_call.1} parent=5 // pred_fallthru
        _
      %p344 = scmp.le.s32.totalorder 2, %s16
      // Predicated region
      $region53: #{tpu_custom_call.1} parent=5 // pred_check
        %p345 = pneg %p344
      $region54: #{tpu_custom_call.1} parent=5 // pred_check_branch
        %347 = sbr.rel (%p345) target = $region56
      $region55: #{tpu_custom_call.1} parent=5 // pred_region
        %s348 = ssub.s32 %s16, 2
        // Predicated region
        $region57: #{tpu_custom_call.1} parent=55 // pred_check
          %p349 = pneg %p132
        $region58: #{tpu_custom_call.1} parent=55 // pred_check_branch
          %351 = sbr.rel (%p349) target = $region60
        $region59: #{tpu_custom_call.1} parent=55 // pred_region
          %s352 = sand.u32 %s117, 1
          %s353 = scalar_lea.sflag [#allocation5], %s352
          %s354 = sand.u32 %s117, 1
          %s355 = smul.addr %s354, 8
          %s356 = scalar_lea.vmem [#allocation8], %s355
          %358 = dma.done %s353, 128
        $region60: #{tpu_custom_call.1} parent=55 // pred_fallthru
          _
      $region56: #{tpu_custom_call.1} parent=5 // pred_fallthru
        _
    $region6: #{tpu_custom_call.1} parent=1 // loop_footer
      %s20 = sadd.s32 1, %s16
    $region7: #{tpu_custom_call.1} parent=1 // loop_footer_branch
      %15 = sbr.rel target = $region3
    $region8: #{tpu_custom_call.1} parent=1 // loop_exit
      _
    %359 = vsyncpa [#allocation4], 1
    %s360 = scalar_lea.sflag [#allocation4], 1
    %361 = vsyncpa %s360, 1
    %362 = vsyncpa [#allocation7], 1
    %363 = vsyncpa [#allocation5], 1
    %s364 = scalar_lea.sflag [#allocation5], 1
    %365 = vsyncpa %s364, 1

</llo_original>
